<compile_context>
chip_gen: v5e
topology: v5e:2x2
jax: 0.10.0
libtpu: 0.0.40
codegen_flags: <defaults>
</compile_context>

<pallas_src>
import functools

import jax
import jax.numpy as jnp
import numpy as np
from jax.experimental import pallas as pl
from jax.experimental.pallas import tpu as pltpu

HIDDEN = 256
BN_EPS = 1e-5
LANE = 128
# bf16 MXU inputs with f32 accumulation are the production choice on v5e/v6e/v7x; kept off
# here so the toy-size demo matches the f32 reference tightly (flip to True for large B).
USE_BF16_MATMUL = False
VMEM_LIMIT_BYTES = 32 * 1024 * 1024  # explicit scoped-VMEM limit, safe on v5e/v6e/v7x


def _round_up(x, m):
    return (x + m - 1) // m * m


# ----------------------------------------------------------------------------
# Pass 1: batch statistics of h = x @ W1 -> folded BN (scale, shift).
# ----------------------------------------------------------------------------
def _stats_kernel(x_ref, w1_ref, gamma_ref, beta_ref, stats_ref,
                  sum_ref, sumsq_ref, *, batch, tile_rows, mask_rows, use_bf16):
    t = pl.program_id(0)

    @pl.when(t == 0)
    def _():
        sum_ref[...] = jnp.zeros_like(sum_ref)
        sumsq_ref[...] = jnp.zeros_like(sumsq_ref)

    cdt = jnp.bfloat16 if use_bf16 else jnp.float32
    h = jnp.dot(x_ref[...].astype(cdt), w1_ref[...].astype(cdt),
                preferred_element_type=jnp.float32)
    if mask_rows:  # last batch tile may be partial
        row = jax.lax.broadcasted_iota(jnp.int32, h.shape, 0)
        h = jnp.where(t * tile_rows + row < batch, h, 0.0)

    sum_ref[...] += jnp.sum(h, axis=0, keepdims=True)
    sumsq_ref[...] += jnp.sum(h * h, axis=0, keepdims=True)

    @pl.when(t == pl.num_programs(0) - 1)
    def _():
        inv_b = jnp.float32(1.0 / batch)
        mean = sum_ref[...] * inv_b
        var = sumsq_ref[...] * inv_b - mean * mean          # biased variance (training BN)
        scale = gamma_ref[...] * jax.lax.rsqrt(var + BN_EPS)
        shift = beta_ref[...] - mean * scale
        stats_ref[...] = jnp.concatenate([scale, shift], axis=0)


# ----------------------------------------------------------------------------
# Pass 2: normalize (single FMA) + ReLU + second matmul, batch-tiled.
# ----------------------------------------------------------------------------
def _apply_kernel(x_ref, w1_ref, w2_ref, b2_ref, stats_ref, o_ref, *, use_bf16):
    cdt = jnp.bfloat16 if use_bf16 else jnp.float32
    h = jnp.dot(x_ref[...].astype(cdt), w1_ref[...].astype(cdt),
                preferred_element_type=jnp.float32)
    h = jnp.maximum(h * stats_ref[0:1, :] + stats_ref[1:2, :], 0.0)
    out = jnp.dot(h.astype(cdt), w2_ref[...].astype(cdt),
                  preferred_element_type=jnp.float32) + b2_ref[...]
    o_ref[...] = out.astype(o_ref.dtype)


def mlp_forward(x, params, *, tile_rows=None):
    w1, b1, gamma, beta, w2, b2 = params
    del b1  # exactly cancelled by the batch-mean subtraction inside BatchNorm
    B, in_size = x.shape
    out_size = w2.shape[1]

    # ---- batch tiling (block sublane dim must be a multiple of 8 or the full dim) ----
    if tile_rows is None:
        tile_rows = B if B <= 512 else 512
    tb = min(tile_rows, B)
    if tb != B and tb % 8 != 0:
        tb = B
    nt = pl.cdiv(B, tb)
    mask_rows = (B % tb) != 0

    # ---- lane-dense / MXU-aligned output: pad out_size up to a multiple of 128 ----
    out_pad = _round_up(out_size, LANE)
    if out_pad != out_size:
        w2 = jnp.pad(w2, ((0, 0), (0, out_pad - out_size)))
        b2 = jnp.pad(b2, ((0, 0), (0, out_pad - out_size)))

    const = lambda t: (0, 0)
    tiled = lambda t: (t, 0)

    # ---- pass 1: per-feature stats -> (scale, shift), accumulators stay in VMEM ----
    stats = pl.pallas_call(
        functools.partial(_stats_kernel, batch=B, tile_rows=tb,
                          mask_rows=mask_rows, use_bf16=USE_BF16_MATMUL),
        out_shape=jax.ShapeDtypeStruct((2, HIDDEN), jnp.float32),
        grid=(nt,),
        in_specs=[
            pl.BlockSpec((tb, in_size), tiled),       # x tile
            pl.BlockSpec((in_size, HIDDEN), const),   # W1 (resident)
            pl.BlockSpec((1, HIDDEN), const),         # gamma
            pl.BlockSpec((1, HIDDEN), const),         # beta
        ],
        out_specs=pl.BlockSpec((2, HIDDEN), const),
        scratch_shapes=[pltpu.VMEM((1, HIDDEN), jnp.float32),
                        pltpu.VMEM((1, HIDDEN), jnp.float32)],
        compiler_params=pltpu.CompilerParams(
            dimension_semantics=("arbitrary",),       # reduction over batch tiles
            vmem_limit_bytes=VMEM_LIMIT_BYTES),
    )(x, w1, gamma, beta)

    # ---- pass 2: apply BN + ReLU + second matmul; batch tiles are independent ----
    out = pl.pallas_call(
        functools.partial(_apply_kernel, use_bf16=USE_BF16_MATMUL),
        out_shape=jax.ShapeDtypeStruct((B, out_pad), jnp.float32),
        grid=(nt,),
        in_specs=[
            pl.BlockSpec((tb, in_size), tiled),       # x tile
            pl.BlockSpec((in_size, HIDDEN), const),   # W1 (resident)
            pl.BlockSpec((HIDDEN, out_pad), const),   # W2 padded (resident)
            pl.BlockSpec((1, out_pad), const),        # b2 padded
            pl.BlockSpec((2, HIDDEN), const),         # (scale, shift)
        ],
        out_specs=pl.BlockSpec((tb, out_pad), tiled),
        compiler_params=pltpu.CompilerParams(
            dimension_semantics=("parallel",),        # megacore sharding on v7x
            vmem_limit_bytes=VMEM_LIMIT_BYTES),
    )(x, w1, w2, b2, stats)

    return out[:, :out_size]


def init_params(key, in_size, out_size):
    """Deterministic init mirroring PyTorch defaults (uniform +-1/sqrt(fan_in))."""
    k1, k2, k3, k4 = jax.random.split(key, 4)
    bound1 = 1.0 / np.sqrt(in_size)
    w1 = jax.random.uniform(k1, (in_size, HIDDEN), jnp.float32, -bound1, bound1)
    b1 = jax.random.uniform(k2, (1, HIDDEN), jnp.float32, -bound1, bound1)
    gamma = jnp.ones((1, HIDDEN), jnp.float32)
    beta = jnp.zeros((1, HIDDEN), jnp.float32)
    bound2 = 1.0 / np.sqrt(HIDDEN)
    w2 = jax.random.uniform(k3, (HIDDEN, out_size), jnp.float32, -bound2, bound2)
    b2 = jax.random.uniform(k4, (1, out_size), jnp.float32, -bound2, bound2)
    return (w1, b1, gamma, beta, w2, b2)


def mlp_reference(x, params):
    """Pure-JAX reference of the PyTorch module (with b1, training-mode BatchNorm)."""
    w1, b1, gamma, beta, w2, b2 = params
    h = x @ w1 + b1
    mean = jnp.mean(h, axis=0, keepdims=True)
    var = jnp.mean((h - mean) ** 2, axis=0, keepdims=True)
    h = (h - mean) * jax.lax.rsqrt(var + BN_EPS) * gamma + beta
    h = jnp.maximum(h, 0.0)
    return h @ w2 + b2


if __name__ == "__main__":
    B, in_size, out_size = 64, 32, 16
    key = jax.random.PRNGKey(0)
    kx, kp = jax.random.split(key)
    x = jax.random.normal(kx, (B, in_size), jnp.float32)
    params = init_params(kp, in_size, out_size)

    # tile_rows=32 -> 2 batch tiles, exercising the grid / stat accumulation path.
    out = mlp_forward(x, params, tile_rows=32)
    out = jax.block_until_ready(out)

    ref = mlp_reference(x, params)
    np.testing.assert_allclose(np.asarray(out), np.asarray(ref), rtol=1e-3, atol=1e-3)

    print("KERNEL_OK")
</pallas_src>

<mosaic_0001>
module attributes {stable_mosaic.version = 11 : i64} {
  func.func @_stats_kernel(%arg0: i32, %arg1: memref<32x32xf32, #tpu.memory_space<vmem>>, %arg2: memref<32x256xf32, #tpu.memory_space<vmem>>, %arg3: memref<1x256xf32, #tpu.memory_space<vmem>>, %arg4: memref<1x256xf32, #tpu.memory_space<vmem>>, %arg5: memref<2x256xf32, #tpu.memory_space<vmem>>, %arg6: memref<1x256xf32, #tpu.memory_space<vmem>>, %arg7: memref<1x256xf32, #tpu.memory_space<vmem>>) attributes {dimension_semantics = [#tpu.dimension_semantics<arbitrary>], iteration_bounds = array<i64: 2>, scalar_prefetch = 0 : i64, scratch_operands = 2 : i64, tpu.core_type = #tpu.core_type<tc>, window_params = [{transform_indices = @transform_0, window_bounds = array<i64: 32, 32>}, {pipeline_mode = #tpu.pipeline_mode<synchronous>, transform_indices = @transform_1, window_bounds = array<i64: 32, 256>}, {pipeline_mode = #tpu.pipeline_mode<synchronous>, transform_indices = @transform_2, window_bounds = array<i64: 1, 256>}, {pipeline_mode = #tpu.pipeline_mode<synchronous>, transform_indices = @transform_3, window_bounds = array<i64: 1, 256>}, {pipeline_mode = #tpu.pipeline_mode<synchronous>, transform_indices = @transform_4, window_bounds = array<i64: 2, 256>}]} {
    %c0_i32 = arith.constant 0 : i32
    %0 = arith.cmpi eq, %arg0, %c0_i32 : i32
    %1 = arith.extui %0 : i1 to i32
    %c0_i32_0 = arith.constant 0 : i32
    %2 = arith.cmpi ne, %1, %c0_i32_0 : i32
    scf.if %2 {
      %cst_15 = arith.constant 0.000000e+00 : f32
      %20 = vector.broadcast %cst_15 : f32 to vector<1x256xf32>
      %c0_16 = arith.constant 0 : index
      %c0_17 = arith.constant 0 : index
      %21 = vector.load %arg6[%c0_16, %c0_17] : memref<1x256xf32, #tpu.memory_space<vmem>>, vector<1x256xf32>
      tpu.vector_store %arg6[%c0_16, %c0_17], %20 {strides = array<i32>} : memref<1x256xf32, #tpu.memory_space<vmem>>, vector<1x256xf32>,
      %cst_18 = arith.constant 0.000000e+00 : f32
      %22 = vector.broadcast %cst_18 : f32 to vector<1x256xf32>
      %c0_19 = arith.constant 0 : index
      %c0_20 = arith.constant 0 : index
      %23 = vector.load %arg7[%c0_19, %c0_20] : memref<1x256xf32, #tpu.memory_space<vmem>>, vector<1x256xf32>
      tpu.vector_store %arg7[%c0_19, %c0_20], %22 {strides = array<i32>} : memref<1x256xf32, #tpu.memory_space<vmem>>, vector<1x256xf32>,
    } else {
    }
    %c0 = arith.constant 0 : index
    %c0_1 = arith.constant 0 : index
    %3 = vector.load %arg1[%c0, %c0_1] : memref<32x32xf32, #tpu.memory_space<vmem>>, vector<32x32xf32>
    %c0_2 = arith.constant 0 : index
    %c0_3 = arith.constant 0 : index
    %4 = vector.load %arg2[%c0_2, %c0_3] : memref<32x256xf32, #tpu.memory_space<vmem>>, vector<32x256xf32>
    %cst = arith.constant dense<0.000000e+00> : vector<32x256xf32>
    %5 = tpu.matmul %3, %4, %cst {dimension_numbers = #tpu.dot_dimension_numbers<[1], [0], [0], [1], [0, 0, 1, 1], [], []>} : vector<32x32xf32>, vector<32x256xf32>, vector<32x256xf32> -> vector<32x256xf32>
    %c0_4 = arith.constant 0 : index
    %c0_5 = arith.constant 0 : index
    %6 = vector.load %arg6[%c0_4, %c0_5] : memref<1x256xf32, #tpu.memory_space<vmem>>, vector<1x256xf32>
    %cst_6 = arith.constant dense<0.000000e+00> : vector<256xf32>
    %7 = vector.multi_reduction <add>, %5, %cst_6 [0] : vector<32x256xf32> to vector<256xf32>
    %8 = vector.shape_cast %7 : vector<256xf32> to vector<1x256xf32>
    %9 = arith.addf %6, %8 : vector<1x256xf32>
    %c0_7 = arith.constant 0 : index
    %c0_8 = arith.constant 0 : index
    %10 = vector.load %arg6[%c0_7, %c0_8] : memref<1x256xf32, #tpu.memory_space<vmem>>, vector<1x256xf32>
    tpu.vector_store %arg6[%c0_7, %c0_8], %9 {strides = array<i32>} : memref<1x256xf32, #tpu.memory_space<vmem>>, vector<1x256xf32>,
    %c0_9 = arith.constant 0 : index
    %c0_10 = arith.constant 0 : index
    %11 = vector.load %arg7[%c0_9, %c0_10] : memref<1x256xf32, #tpu.memory_space<vmem>>, vector<1x256xf32>
    %12 = arith.mulf %5, %5 : vector<32x256xf32>
    %cst_11 = arith.constant dense<0.000000e+00> : vector<256xf32>
    %13 = vector.multi_reduction <add>, %12, %cst_11 [0] : vector<32x256xf32> to vector<256xf32>
    %14 = vector.shape_cast %13 : vector<256xf32> to vector<1x256xf32>
    %15 = arith.addf %11, %14 : vector<1x256xf32>
    %c0_12 = arith.constant 0 : index
    %c0_13 = arith.constant 0 : index
    %16 = vector.load %arg7[%c0_12, %c0_13] : memref<1x256xf32, #tpu.memory_space<vmem>>, vector<1x256xf32>
    tpu.vector_store %arg7[%c0_12, %c0_13], %15 {strides = array<i32>} : memref<1x256xf32, #tpu.memory_space<vmem>>, vector<1x256xf32>,
    %c1_i32 = arith.constant 1 : i32
    %17 = arith.cmpi eq, %arg0, %c1_i32 : i32
    %18 = arith.extui %17 : i1 to i32
    %c0_i32_14 = arith.constant 0 : i32
    %19 = arith.cmpi ne, %18, %c0_i32_14 : i32
    scf.if %19 {
      %c0_15 = arith.constant 0 : index
      %c0_16 = arith.constant 0 : index
      %20 = vector.load %arg6[%c0_15, %c0_16] : memref<1x256xf32, #tpu.memory_space<vmem>>, vector<1x256xf32>
      %cst_17 = arith.constant 1.562500e-02 : f32
      %21 = vector.broadcast %cst_17 : f32 to vector<1x256xf32>
      %22 = arith.mulf %20, %21 : vector<1x256xf32>
      %c0_18 = arith.constant 0 : index
      %c0_19 = arith.constant 0 : index
      %23 = vector.load %arg7[%c0_18, %c0_19] : memref<1x256xf32, #tpu.memory_space<vmem>>, vector<1x256xf32>
      %cst_20 = arith.constant 1.562500e-02 : f32
      %24 = vector.broadcast %cst_20 : f32 to vector<1x256xf32>
      %25 = arith.mulf %23, %24 : vector<1x256xf32>
      %26 = arith.mulf %22, %22 : vector<1x256xf32>
      %27 = arith.subf %25, %26 : vector<1x256xf32>
      %c0_21 = arith.constant 0 : index
      %c0_22 = arith.constant 0 : index
      %28 = vector.load %arg3[%c0_21, %c0_22] : memref<1x256xf32, #tpu.memory_space<vmem>>, vector<1x256xf32>
      %cst_23 = arith.constant 9.99999974E-6 : f32
      %29 = vector.broadcast %cst_23 : f32 to vector<1x256xf32>
      %30 = arith.addf %27, %29 : vector<1x256xf32>
      %31 = math.rsqrt %30 : vector<1x256xf32>
      %32 = arith.mulf %28, %31 : vector<1x256xf32>
      %c0_24 = arith.constant 0 : index
      %c0_25 = arith.constant 0 : index
      %33 = vector.load %arg4[%c0_24, %c0_25] : memref<1x256xf32, #tpu.memory_space<vmem>>, vector<1x256xf32>
      %34 = arith.mulf %22, %32 : vector<1x256xf32>
      %35 = arith.subf %33, %34 : vector<1x256xf32>
      %36 = tpu.concatenate %32, %35 in 0 : vector<1x256xf32>, vector<1x256xf32> -> vector<2x256xf32>
      %c0_26 = arith.constant 0 : index
      %c0_27 = arith.constant 0 : index
      %37 = vector.load %arg5[%c0_26, %c0_27] : memref<2x256xf32, #tpu.memory_space<vmem>>, vector<2x256xf32>
      tpu.vector_store %arg5[%c0_26, %c0_27], %36 {strides = array<i32>} : memref<2x256xf32, #tpu.memory_space<vmem>>, vector<2x256xf32>,
    } else {
    }
    return
  }
  func.func @transform_0(%arg0: i32) -> (i32, i32) {
    %c0_i32 = arith.constant 0 : i32
    %c0_i32_0 = arith.constant 0 : i32
    return %arg0, %c0_i32 : i32, i32
  }
  func.func @transform_1(%arg0: i32) -> (i32, i32) {
    %c0_i32 = arith.constant 0 : i32
    %c0_i32_0 = arith.constant 0 : i32
    %c0_i32_1 = arith.constant 0 : i32
    return %c0_i32, %c0_i32_0 : i32, i32
  }
  func.func @transform_2(%arg0: i32) -> (i32, i32) {
    %c0_i32 = arith.constant 0 : i32
    %c0_i32_0 = arith.constant 0 : i32
    %c0_i32_1 = arith.constant 0 : i32
    return %c0_i32, %c0_i32_0 : i32, i32
  }
  func.func @transform_3(%arg0: i32) -> (i32, i32) {
    %c0_i32 = arith.constant 0 : i32
    %c0_i32_0 = arith.constant 0 : i32
    %c0_i32_1 = arith.constant 0 : i32
    return %c0_i32, %c0_i32_0 : i32, i32
  }
  func.func @transform_4(%arg0: i32) -> (i32, i32) {
    %c0_i32 = arith.constant 0 : i32
    %c0_i32_0 = arith.constant 0 : i32
    %c0_i32_1 = arith.constant 0 : i32
    return %c0_i32, %c0_i32_0 : i32, i32
  }
}

</mosaic_0001>

<llo_original>
// kernel: tpu_custom_call.1
$region0: #{tpu_custom_call.1}
  #allocation0 [shape = 'u32[]', space=smem, size = 0x4, offset = 0x4, fixed_abs, tag = 'smem constant byte address 0x4 - core index']
  #allocation1 [shape = 'u32[72,128]{1,0:T(1,128)}', space=vmem, size = 0x9000, scoped, tag = 'internal scratch']
  #allocation2 [shape = 'f32[1,256]{1,0:T(1,128)}', space=vmem, size = 0x400, scoped, tag = 'scratch operand']
  #allocation3 [shape = 'f32[1,256]{1,0:T(1,128)}', space=vmem, size = 0x400, scoped, tag = 'scratch operand']
  %s0 = inlined_call_operand.vmem [shape: f32[64,32], index: 0, kind: input, shape index: {}]
  %s1 = inlined_call_operand.vmem [shape: f32[32,256], index: 1, kind: input, shape index: {}]
  %s2 = inlined_call_operand.vmem [shape: f32[1,256], index: 2, kind: input, shape index: {}]
  %s3 = inlined_call_operand.vmem [shape: f32[1,256], index: 3, kind: input, shape index: {}]
  %s4 = inlined_call_operand.hbm [shape: f32[2,256], index: 4, kind: output, shape index: {}]
  %s5 = sld [smem:[#allocation0]]
  $region57: #{tpu_custom_call.1} parent=0
    _
  %s7 = ssub.s32 1, %s5
  %s8 = scalar_select 0, %s7, %s5
  $region1: #{tpu_custom_call.1} parent=0
    #allocation4 [shape = 'u8[2048]{0}', space=vmem, size = 0x800, scoped, tag = 'output window, operand 0, single buffered']
    #allocation5 [shape = 's32[2]{0}', space=sflag, size = 0x8, scoped, tag = 'scoped memory for tpu_custom_call.1']
    %9 = vsyncpa [#allocation5], 0
    loop: start=0, step=1, limit=4
    $region2: #{tpu_custom_call.1} parent=1 // loop_pre_header
      _
    $region3: #{tpu_custom_call.1} parent=1 // loop_header
      %s11 = sphi 0, %s15
      %p12 = scmp.ge.s32.totalorder %s11, 4
      %s21 = sphi 0, %s23
      %s24 = sphi 0, %s21
      %s25 = sphi 0, %s24
      %s41 = sphi 0, %s25
      %s45 = sphi 0, %s45
      %s47 = sphi 0, %s45
      %s48 = sphi 0, %s47
      %s62 = sphi 0, %s48
      %s66 = sphi 0, %s66
      %s68 = sphi 0, %s66
      %s69 = sphi 0, %s68
      %s83 = sphi 0, %s69
      %s87 = sphi 0, %s87
      %s89 = sphi 0, %s87
      %s90 = sphi 0, %s89
      %s104 = sphi 0, %s90
      %s108 = sphi 0, %s108
      %s110 = sphi 0, %s108
      %s111 = sphi 0, %s110
      %s125 = sphi 0, %s111
    $region4: #{tpu_custom_call.1} parent=1 // loop_header_branch
      %14 = sbr.rel (%p12) target = $region8
    $region5: #{tpu_custom_call.1} parent=1 // loop_body
      %s16 = ssub.s32 %s11, 1
      %s17 = ssub.s32 %s11, 2
      %s18 = sadd.s32 %s11, 1
      %s19 = ssub.s32 %s11, %s18
      %p20 = scmp.eq.s32.totalorder %s19, 0
      %s22 = sadd.s32 %s21, 1
      %s23 = scalar_select %p20, %s21, %s22
      %p26 = pneg %p20
      %p27 = scmp.eq.s32.totalorder %s11, 1
      %p28 = por %p26, %p27
      %p29 = scmp.ne.s32.totalorder %s21, %s24
      %p30 = scmp.eq.s32.totalorder %s11, 0
      %p31 = por %p29, %p30
      %p32 = scmp.ne.s32.totalorder %s21, %s24
      %p33 = scmp.eq.s32.totalorder %s16, 1
      %p34 = por %p32, %p33
      %p35 = scmp.ne.s32.totalorder %s24, %s25
      %p36 = scmp.eq.s32.totalorder %s16, 0
      %p37 = por %p35, %p36
      %p38 = scmp.ne.s32.totalorder %s24, %s25
      %p39 = scmp.eq.s32.totalorder %s17, 1
      %p40 = por %p38, %p39
      %p42 = scmp.ne.s32.totalorder %s25, %s41
      %p43 = scmp.eq.s32.totalorder %s17, 0
      %p44 = por %p42, %p43
      %s46 = sadd.s32 %s45, 1
      %p49 = scmp.eq.s32.totalorder %s11, 1
      %p50 = scmp.ne.s32.totalorder %s45, %s47
      %p51 = scmp.eq.s32.totalorder %s11, 0
      %p52 = por %p50, %p51
      %p53 = scmp.ne.s32.totalorder %s45, %s47
      %p54 = scmp.eq.s32.totalorder %s16, 1
      %p55 = por %p53, %p54
      %p56 = scmp.ne.s32.totalorder %s47, %s48
      %p57 = scmp.eq.s32.totalorder %s16, 0
      %p58 = por %p56, %p57
      %p59 = scmp.ne.s32.totalorder %s47, %s48
      %p60 = scmp.eq.s32.totalorder %s17, 1
      %p61 = por %p59, %p60
      %p63 = scmp.ne.s32.totalorder %s48, %s62
      %p64 = scmp.eq.s32.totalorder %s17, 0
      %p65 = por %p63, %p64
      %s67 = sadd.s32 %s66, 1
      %p70 = scmp.eq.s32.totalorder %s11, 1
      %p71 = scmp.ne.s32.totalorder %s66, %s68
      %p72 = scmp.eq.s32.totalorder %s11, 0
      %p73 = por %p71, %p72
      %p74 = scmp.ne.s32.totalorder %s66, %s68
      %p75 = scmp.eq.s32.totalorder %s16, 1
      %p76 = por %p74, %p75
      %p77 = scmp.ne.s32.totalorder %s68, %s69
      %p78 = scmp.eq.s32.totalorder %s16, 0
      %p79 = por %p77, %p78
      %p80 = scmp.ne.s32.totalorder %s68, %s69
      %p81 = scmp.eq.s32.totalorder %s17, 1
      %p82 = por %p80, %p81
      %p84 = scmp.ne.s32.totalorder %s69, %s83
      %p85 = scmp.eq.s32.totalorder %s17, 0
      %p86 = por %p84, %p85
      %s88 = sadd.s32 %s87, 1
      %p91 = scmp.eq.s32.totalorder %s11, 1
      %p92 = scmp.ne.s32.totalorder %s87, %s89
      %p93 = scmp.eq.s32.totalorder %s11, 0
      %p94 = por %p92, %p93
      %p95 = scmp.ne.s32.totalorder %s87, %s89
      %p96 = scmp.eq.s32.totalorder %s16, 1
      %p97 = por %p95, %p96
      %p98 = scmp.ne.s32.totalorder %s89, %s90
      %p99 = scmp.eq.s32.totalorder %s16, 0
      %p100 = por %p98, %p99
      %p101 = scmp.ne.s32.totalorder %s89, %s90
      %p102 = scmp.eq.s32.totalorder %s17, 1
      %p103 = por %p101, %p102
      %p105 = scmp.ne.s32.totalorder %s90, %s104
      %p106 = scmp.eq.s32.totalorder %s17, 0
      %p107 = por %p105, %p106
      %s109 = sadd.s32 %s108, 1
      %p112 = scmp.eq.s32.totalorder %s11, 1
      %p113 = scmp.ne.s32.totalorder %s108, %s110
      %p114 = scmp.eq.s32.totalorder %s11, 0
      %p115 = por %p113, %p114
      %p116 = scmp.ne.s32.totalorder %s108, %s110
      %p117 = scmp.eq.s32.totalorder %s16, 1
      %p118 = por %p116, %p117
      %p119 = scmp.ne.s32.totalorder %s110, %s111
      %p120 = scmp.eq.s32.totalorder %s16, 0
      %p121 = por %p119, %p120
      %p122 = scmp.ne.s32.totalorder %s110, %s111
      %p123 = scmp.eq.s32.totalorder %s17, 1
      %p124 = por %p122, %p123
      %p126 = scmp.ne.s32.totalorder %s111, %s125
      %p127 = scmp.eq.s32.totalorder %s17, 0
      %p128 = por %p126, %p127
      %p129 = scmp.le.s32.totalorder 1, %s11
      %p130 = scmp.lt.s32.totalorder %s11, 3
      %p131 = pnand %p129, %p130
      %p132 = pneg %p131
      // Predicated region
      $region9: #{tpu_custom_call.1} parent=5 // pred_check
        _
      $region10: #{tpu_custom_call.1} parent=5 // pred_check_branch
        %134 = sbr.rel (%p131) target = $region12
      $region11: #{tpu_custom_call.1} parent=5 // pred_region
        %s135 = ssub.s32 %s11, 1
        // Predicated region
        $region13: #{tpu_custom_call.1} parent=11 // pred_check
          %p136 = pneg %p58
        $region14: #{tpu_custom_call.1} parent=11 // pred_check_branch
          %138 = sbr.rel (%p136) target = $region16
        $region15: #{tpu_custom_call.1} parent=11 // pred_region
          _
        $region16: #{tpu_custom_call.1} parent=11 // pred_fallthru
          _
        // Predicated region
        $region17: #{tpu_custom_call.1} parent=11 // pred_check
          %p139 = pneg %p79
        $region18: #{tpu_custom_call.1} parent=11 // pred_check_branch
          %141 = sbr.rel (%p139) target = $region20
        $region19: #{tpu_custom_call.1} parent=11 // pred_region
          _
        $region20: #{tpu_custom_call.1} parent=11 // pred_fallthru
          _
        // Predicated region
        $region21: #{tpu_custom_call.1} parent=11 // pred_check
          %p142 = pneg %p100
        $region22: #{tpu_custom_call.1} parent=11 // pred_check_branch
          %144 = sbr.rel (%p142) target = $region24
        $region23: #{tpu_custom_call.1} parent=11 // pred_region
          _
        $region24: #{tpu_custom_call.1} parent=11 // pred_fallthru
          _
      $region12: #{tpu_custom_call.1} parent=5 // pred_fallthru
        _
      %p145 = scmp.lt.s32.totalorder %s11, 2
      // Predicated region
      $region25: #{tpu_custom_call.1} parent=5 // pred_check
        %p146 = pneg %p145
      $region26: #{tpu_custom_call.1} parent=5 // pred_check_branch
        %148 = sbr.rel (%p146) target = $region28
      $region27: #{tpu_custom_call.1} parent=5 // pred_region
        // Predicated region
        $region29: #{tpu_custom_call.1} parent=27 // pred_check
          %p149 = pneg %p31
        $region30: #{tpu_custom_call.1} parent=27 // pred_check_branch
          %151 = sbr.rel (%p149) target = $region32
        $region31: #{tpu_custom_call.1} parent=27 // pred_region
          %s152 = smul.u32 4, %s11
          %p153 = scmp.lt.s32.totalorder %s152, 7
          %s154 = scalar_select %p153, %s152, 7
          %s155 = smul.addr %s154, 8
          %s156 = scalar_lea.vmem %s0, %s155
          %s157 = smul.u32 4, %s11
        $region32: #{tpu_custom_call.1} parent=27 // pred_fallthru
          _
      $region28: #{tpu_custom_call.1} parent=5 // pred_fallthru
        _
      %p158 = scmp.le.s32.totalorder 1, %s11
      %p159 = scmp.lt.s32.totalorder %s11, 3
      %p160 = pnand %p158, %p159
      %p161 = pneg %p160
      // Predicated region
      $region33: #{tpu_custom_call.1} parent=5 // pred_check
        _
      $region34: #{tpu_custom_call.1} parent=5 // pred_check_branch
        %163 = sbr.rel (%p160) target = $region36
      $region35: #{tpu_custom_call.1} parent=5 // pred_region
        %s164 = ssub.s32 %s11, 1
        %s165 = smul.u32 4, %s16
        %p166 = scmp.lt.s32.totalorder %s165, 7
        %s167 = scalar_select %p166, %s165, 7
        %s168 = smul.addr %s167, 8
        %s169 = scalar_lea.vmem %s0, %s168
        %p170 = pneg %p37
        %p171 = pneg %p34
        %p172 = pneg %p58
        %p173 = pneg %p55
        %p174 = pneg %p79
        %p175 = pneg %p76
        %p176 = pneg %p100
        %p177 = pneg %p97
        %p178 = pneg %p121
        %p179 = pneg %p118
        %s180 = smul.u32 4, %s16
        %p181 = scmp.lt.s32.totalorder %s180, 7
        %s182 = scalar_select %p181, %s180, 7
        %s183 = smul.addr %s182, 8
        %s184 = scalar_lea.vmem %s0, %s183
        %s185 = smul.u32 4, %s16
        %p186 = scmp.eq.s32.totalorder %s16, 0
        // Predicated region
        $region37: #{tpu_custom_call.1} parent=35 // pred_check
          %p187 = pneg %p186
        $region38: #{tpu_custom_call.1} parent=35 // pred_check_branch
          %189 = sbr.rel (%p187) target = $region40
        $region39: #{tpu_custom_call.1} parent=35 // pred_region
          %v190 = vlaneseq
          %vm191 = vcmp.ge.s32.totalorder %v190, 0
          %vm192 = vcmp.lt.s32.totalorder %v190, 256
          %vm193 = vmand %vm191, %vm192
          %194 = vst.msk [vmem:[#allocation2] sm:$0x3] %vm193, 0.0
          %195 = vst.msk [vmem:[#allocation3] sm:$0x3] %vm193, 0.0
        $region40: #{tpu_custom_call.1} parent=35 // pred_fallthru
          _
        %v196 = vld [vmem:[%s184] sm:$0xff]
        %v197 = vld [vmem:[%s184 + $0x8] sm:$0xff]
        %v198 = vld [vmem:[%s184 + $0x10] sm:$0xff]
        %v199 = vld [vmem:[%s184 + $0x18] sm:$0xff]
        %v200 = vld [vmem:[%s1] sm:$0xff]
        %v201 = vld [vmem:[%s1 + $0x8] sm:$0xff]
        %v202 = vld [vmem:[%s1 + $0x10] sm:$0xff]
        %v203 = vld [vmem:[%s1 + $0x18] sm:$0xff]
        %v204 = vld [vmem:[%s1 + $0x20] sm:$0xff]
        %v205 = vld [vmem:[%s1 + $0x28] sm:$0xff]
        %v206 = vld [vmem:[%s1 + $0x30] sm:$0xff]
        %v207 = vld [vmem:[%s1 + $0x38] sm:$0xff]
        %vm208 = vcmask 261120
        %v210 = vsel %vm208, %v196, 0
        %v213 = vsel %vm208, %v197, 0
        %v216 = vsel %vm208, %v198, 0
        %v219 = vsel %vm208, %v199, 0
        %221 = vmatpush.msra.mxu0 0.0
        %222 = vmatpush.msra.mxu0 0.0
        %223 = vmatpush.msra.mxu0 0.0
        %224 = vmatpush.msra.mxu0 0.0
        %225 = vmatpush.msra.mxu0 0.0
        %226 = vmatpush.msra.mxu0 0.0
        %227 = vmatpush.msra.mxu0 0.0
        %228 = vmatpush.msra.mxu0 0.0
        %229 = vmatpush.msra.mxu0 0.0
        %230 = vmatpush.msra.mxu0 0.0
        %231 = vmatpush.msra.mxu0 0.0
        %232 = vmatpush.msra.mxu0 0.0
        %233 = vmatpush.msra.mxu0 %v206
        %234 = vmatpush.msra.mxu0 %v204
        %235 = vmatpush.msra.mxu0 %v202
        %236 = vmatpush.msra.mxu0 %v200
        %237 = vmatmul.f32.gmra.mxu0 %v210
        %v238 = vpop.f32.mrf.mxu0
        %v239 = vadd.f32 0.0, %v238
        %240 = vmatmul.f32.gmra.mxu0 %v213
        %v241 = vpop.f32.mrf.mxu0
        %v242 = vadd.f32 0.0, %v241
        %243 = vmatmul.f32.gmra.mxu0 %v216
        %v244 = vpop.f32.mrf.mxu0
        %v245 = vadd.f32 0.0, %v244
        %246 = vmatmul.f32.gmra.mxu0 %v219
        %v247 = vpop.f32.mrf.mxu0
        %v248 = vadd.f32 0.0, %v247
        %249 = vdwg.mxu0
        %250 = vmatpush.msra.mxu0 0.0
        %251 = vmatpush.msra.mxu0 0.0
        %252 = vmatpush.msra.mxu0 0.0
        %253 = vmatpush.msra.mxu0 0.0
        %254 = vmatpush.msra.mxu0 0.0
        %255 = vmatpush.msra.mxu0 0.0
        %256 = vmatpush.msra.mxu0 0.0
        %257 = vmatpush.msra.mxu0 0.0
        %258 = vmatpush.msra.mxu0 0.0
        %259 = vmatpush.msra.mxu0 0.0
        %260 = vmatpush.msra.mxu0 0.0
        %261 = vmatpush.msra.mxu0 0.0
        %262 = vmatpush.msra.mxu0 %v207
        %263 = vmatpush.msra.mxu0 %v205
        %264 = vmatpush.msra.mxu0 %v203
        %265 = vmatpush.msra.mxu0 %v201
        %266 = vmatmul.f32.gmra.mxu0 %v210
        %v267 = vpop.f32.mrf.mxu0
        %v268 = vadd.f32 0.0, %v267
        %269 = vmatmul.f32.gmra.mxu0 %v213
        %v270 = vpop.f32.mrf.mxu0
        %v271 = vadd.f32 0.0, %v270
        %272 = vmatmul.f32.gmra.mxu0 %v216
        %v273 = vpop.f32.mrf.mxu0
        %v274 = vadd.f32 0.0, %v273
        %275 = vmatmul.f32.gmra.mxu0 %v219
        %v276 = vpop.f32.mrf.mxu0
        %v277 = vadd.f32 0.0, %v276
        %278 = vdwg.mxu0
        %v279 = vld [vmem:[#allocation2] sm:$0x3]
        %v280 = vadd.f32 %v239, %v242
        %v281 = vadd.f32 %v280, %v245
        %v282 = vadd.f32 %v281, %v248
        %v283 = vrot.slane %v282, 4
        %v284 = vadd.f32 %v282, %v283
        %v285 = vrot.slane %v284, 2
        %v286 = vadd.f32 %v284, %v285
        %v287 = vrot.slane %v286, 1
        %v288 = vadd.f32 %v286, %v287
        %v289 = vadd.f32 %v268, %v271
        %v290 = vadd.f32 %v289, %v274
        %v291 = vadd.f32 %v290, %v277
        %v292 = vrot.slane %v291, 4
        %v293 = vadd.f32 %v291, %v292
        %v294 = vrot.slane %v293, 2
        %v295 = vadd.f32 %v293, %v294
        %v296 = vrot.slane %v295, 1
        %v297 = vadd.f32 %v295, %v296
        %v300 = vrot.slane %v297, 7
        %vm301 = vcmask 1040384
        %v302 = vsel %vm301, %v288, %v300
        %v304 = vadd.f32 %v279, %v302
        %v305 = vlaneseq
        %vm306 = vcmp.ge.s32.totalorder %v305, 0
        %vm307 = vcmp.lt.s32.totalorder %v305, 256
        %vm308 = vmand %vm306, %vm307
        %309 = vst.msk [vmem:[#allocation2] sm:$0x3] %vm308, %v304
        %v310 = vld [vmem:[#allocation3] sm:$0x3]
        %v311 = vmul.f32 %v239, %v239
        %v312 = vmul.f32 %v268, %v268
        %v313 = vmul.f32 %v242, %v242
        %v314 = vmul.f32 %v271, %v271
        %v315 = vmul.f32 %v245, %v245
        %v316 = vmul.f32 %v274, %v274
        %v317 = vmul.f32 %v248, %v248
        %v318 = vmul.f32 %v277, %v277
        %v319 = vadd.f32 %v311, %v313
        %v320 = vadd.f32 %v319, %v315
        %v321 = vadd.f32 %v320, %v317
        %v322 = vrot.slane %v321, 4
        %v323 = vadd.f32 %v321, %v322
        %v324 = vrot.slane %v323, 2
        %v325 = vadd.f32 %v323, %v324
        %v326 = vrot.slane %v325, 1
        %v327 = vadd.f32 %v325, %v326
        %v328 = vadd.f32 %v312, %v314
        %v329 = vadd.f32 %v328, %v316
        %v330 = vadd.f32 %v329, %v318
        %v331 = vrot.slane %v330, 4
        %v332 = vadd.f32 %v330, %v331
        %v333 = vrot.slane %v332, 2
        %v334 = vadd.f32 %v332, %v333
        %v335 = vrot.slane %v334, 1
        %v336 = vadd.f32 %v334, %v335
        %v339 = vrot.slane %v336, 7
        %v340 = vsel %vm301, %v327, %v339
        %v342 = vadd.f32 %v310, %v340
        %343 = vst.msk [vmem:[#allocation3] sm:$0x3] %vm308, %v342
        %p344 = scmp.eq.s32.totalorder %s16, 1
        // Predicated region
        $region41: #{tpu_custom_call.1} parent=35 // pred_check
          %p345 = pneg %p344
        $region42: #{tpu_custom_call.1} parent=35 // pred_check_branch
          %347 = sbr.rel (%p345) target = $region44
        $region43: #{tpu_custom_call.1} parent=35 // pred_region
          %v348 = vld [vmem:[#allocation2] sm:$0x3]
          %v349 = vmul.f32 %v348, 0.015625
          %v350 = vld [vmem:[#allocation3] sm:$0x3]
          %v351 = vmul.f32 %v350, 0.015625
          %v352 = vmul.f32 %v349, %v349
          %v353 = vsub.f32 %v351, %v352
          %v354 = vld [vmem:[%s2] sm:$0x3]
          %v355 = vadd.f32 %v353, 1e-05
          %v356 = vrsqrt.pop %v355
          %v357 = vmul.f32 %v356, %v355
          %v358 = vmul.f32 %v357, %v356
          %v359 = vmul.f32 0.5, %v358
          %v360 = vsub.f32 1.5, %v359
          %v361 = vmul.f32 %v356, %v360
          %vm362 = vweird.f32 %v355
          %vm363 = vweird.f32 %v356
          %vm364 = vmor %vm362, %vm363
          %v365 = vsel %vm364, %v356, %v361
          %v366 = vmul.f32 %v354, %v365
          %v367 = vld [vmem:[%s3] sm:$0x3]
          %v368 = vmul.f32 %v349, %v366
          %v369 = vsub.f32 %v367, %v368
          %v371 = vperm.slane %v366, 0
          %v372 = vperm.slane %v366, 1
          %v376 = vperm.slane %v369, 0
          %v377 = vperm.slane %v369, 1
          %v380 = vsel %vm301, %v371, %v376
          %v381 = vsel %vm301, %v372, %v377
          %v384 = vrot.slane %v381, 6
          %vm385 = vcmask 1041408
          %v386 = vsel %vm385, %v380, %v384
          %388 = vst [vmem:[#allocation4] sm:$0xf] %v386
        $region44: #{tpu_custom_call.1} parent=35 // pred_fallthru
          _
        // Predicated region
        $region45: #{tpu_custom_call.1} parent=35 // pred_check
          %p389 = pneg %p118
        $region46: #{tpu_custom_call.1} parent=35 // pred_check_branch
          %391 = sbr.rel (%p389) target = $region48
        $region47: #{tpu_custom_call.1} parent=35 // pred_region
          %393 = vsyncadd [#allocation5], 0
          %s395 = sshll.u32 [#allocation4], 4
          %s396 = int_to_ptr.vmem [resolvable:$true] %s395
          %s397 = sshll.u32 %s4, 4
          %s398 = int_to_ptr.hbm [resolvable:$true] %s397
          %400 = dma.vmem_to_hbm [thread:$0]  %s396, 64, %s398, [#allocation5]
        $region48: #{tpu_custom_call.1} parent=35 // pred_fallthru
          _
        // Predicated region
        $region49: #{tpu_custom_call.1} parent=35 // pred_check
          %p401 = pneg %p118
        $region50: #{tpu_custom_call.1} parent=35 // pred_check_branch
          %403 = sbr.rel (%p401) target = $region52
        $region51: #{tpu_custom_call.1} parent=35 // pred_region
          %405 = dma.done [#allocation5], 64
        $region52: #{tpu_custom_call.1} parent=35 // pred_fallthru
          _
      $region36: #{tpu_custom_call.1} parent=5 // pred_fallthru
        _
      %p406 = scmp.le.s32.totalorder 2, %s11
      // Predicated region
      $region53: #{tpu_custom_call.1} parent=5 // pred_check
        %p407 = pneg %p406
      $region54: #{tpu_custom_call.1} parent=5 // pred_check_branch
        %409 = sbr.rel (%p407) target = $region56
      $region55: #{tpu_custom_call.1} parent=5 // pred_region
        %s410 = ssub.s32 %s11, 2
      $region56: #{tpu_custom_call.1} parent=5 // pred_fallthru
        _
    $region6: #{tpu_custom_call.1} parent=1 // loop_footer
      %s15 = sadd.s32 1, %s11
    $region7: #{tpu_custom_call.1} parent=1 // loop_footer_branch
      %10 = sbr.rel target = $region3
    $region8: #{tpu_custom_call.1} parent=1 // loop_exit
      _
    %411 = vsyncpa [#allocation5], 1
    %s412 = scalar_lea.sflag [#allocation5], 1
    %413 = vsyncpa %s412, 1

</llo_original>
